<compile_context>
chip_gen: v6e
topology: v6e:2x2x1
jax: 0.10.0
libtpu: 0.0.40
codegen_flags: <defaults>
</compile_context>

<pallas_src>
import functools

import jax
import jax.numpy as jnp
from jax import lax
from jax.experimental import pallas as pl
from jax.experimental.pallas import tpu as pltpu


# ---------------------------------------------------------------------------
# Kernels
# ---------------------------------------------------------------------------
def _accumulate_stats(y, i, sum_acc, sq_acc, *, m_valid, tm, grid_m):
    """Element-wise accumulation of y and y^2 into (C_out, tm) scratch.

    Padded columns (>= m_valid) are masked out of the statistics, but the mask is
    only emitted for the last tile and only when a partial tile actually exists.
    """
    @pl.when(i == 0)
    def _():
        sum_acc[...] = jnp.zeros_like(sum_acc)
        sq_acc[...] = jnp.zeros_like(sq_acc)

    if m_valid % tm != 0:                       # static: a partial tail tile exists
        @pl.when(i == grid_m - 1)
        def _():
            col = i * tm + lax.broadcasted_iota(jnp.int32, y.shape, 1)
            ym = jnp.where(col < m_valid, y, 0.0)
            sum_acc[...] += ym
            sq_acc[...] += ym * y               # ym*y == masked y^2

        @pl.when(i != grid_m - 1)
        def _():
            sum_acc[...] += y
            sq_acc[...] += y * y
    else:
        sum_acc[...] += y
        sq_acc[...] += y * y


def _fused_conv_bn_relu_kernel(w_ref, p_ref, b_ref, g_ref, beta_ref, o_ref,
                               sum_acc, sq_acc, *, m_valid, tm, grid_m, eps):
    """Fused conv (im2col matmul + bias) + BN batch-stats + BN affine + ReLU.

    w_ref    : (C_out, K)        p_ref  : (K, tm)         b_ref : (C_out, 1)
    g_ref    : (C_out, 1) gamma  beta_ref: (C_out, 1) beta
    o_ref    : (grid_m, C_out, tm)  VMEM-resident output (same block for all i)
    sum_acc, sq_acc : (C_out, tm) f32 element-wise stat accumulators (scratch).
    """
    i = pl.program_id(0)

    # MXU matmul, f32 accumulation; lane-dense (C_out, tm) tile.
    y = jnp.dot(w_ref[...], p_ref[...], preferred_element_type=jnp.float32) + b_ref[...]

    # Stash the raw conv tile into the VMEM-resident output (leading-axis dyn index).
    o_ref[i] = y

    _accumulate_stats(y, i, sum_acc, sq_acc, m_valid=m_valid, tm=tm, grid_m=grid_m)

    # Final step: one cross-lane reduce, build the BN affine, apply affine+ReLU
    # in place over the whole resident output; it is written back to HBM once.
    @pl.when(i == grid_m - 1)
    def _():
        inv_m = 1.0 / m_valid
        mean = jnp.sum(sum_acc[...], axis=1, keepdims=True) * inv_m        # (C_out, 1)
        var = jnp.sum(sq_acc[...], axis=1, keepdims=True) * inv_m - mean * mean
        scale = g_ref[...] * lax.rsqrt(var + eps)
        shift = beta_ref[...] - mean * scale
        o_ref[...] = jnp.maximum(o_ref[...] * scale[None] + shift[None], 0.0)


def _conv_stats_kernel(w_ref, p_ref, b_ref, o_ref, sum_ref, sq_ref,
                       sum_acc, sq_acc, *, m_valid, tm, grid_m):
    """Fallback kernel A: conv (matmul + bias) with BN batch-stat accumulation."""
    i = pl.program_id(0)
    y = jnp.dot(w_ref[...], p_ref[...], preferred_element_type=jnp.float32) + b_ref[...]
    o_ref[...] = y

    _accumulate_stats(y, i, sum_acc, sq_acc, m_valid=m_valid, tm=tm, grid_m=grid_m)

    @pl.when(i == grid_m - 1)
    def _():
        sum_ref[...] = jnp.sum(sum_acc[...], axis=1, keepdims=True)
        sq_ref[...] = jnp.sum(sq_acc[...], axis=1, keepdims=True)


def _bn_relu_kernel(x_ref, scale_ref, shift_ref, o_ref):
    """Fallback kernel B: fused affine BatchNorm + ReLU on lane-dense tiles."""
    o_ref[...] = jnp.maximum(x_ref[...] * scale_ref[...] + shift_ref[...], 0.0)


# ---------------------------------------------------------------------------
# Wrapper (glue: im2col, path selection, upsample/reshape)
# ---------------------------------------------------------------------------
_FUSED_VMEM_BUDGET = 40 * 1024 * 1024   # conservative vs v7x's 64 MiB physical VMEM


def deconv_block_forward(x_nchw, conv_w, conv_b, gamma, beta,
                         *, stride, padding, eps=1e-5):
    N, C_in, H, W = x_nchw.shape
    C_out, _, kh, kw = conv_w.shape
    H_out = (H + 2 * padding - kh) // stride + 1
    W_out = (W + 2 * padding - kw) // stride + 1
    M = N * H_out * W_out
    K = C_in * kh * kw

    # --- glue: im2col directly in NCHW order -> (K, M) so the matmul output is
    #     (C_out, M) with the long M axis in lanes.  K index = c*kh*kw + ki*kw + kj,
    #     matching PyTorch's Conv2d weight flattening.
    # TODO(synk): replace host-side im2col (kh*kw-fold expansion) with an in-kernel
    # sliding-window conv that DMAs NCHW input row blocks + halo (memory_space=pl.ANY,
    # pl.Buffered(3)) and accumulates kh*kw small matmuls into the VMEM accumulator.
    x = x_nchw.astype(jnp.float32)
    x_pad = jnp.pad(x, ((0, 0), (0, 0), (padding, padding), (padding, padding)))
    cols = []
    for ki in range(kh):
        for kj in range(kw):
            cols.append(x_pad[:, :, ki:ki + stride * H_out:stride,
                                    kj:kj + stride * W_out:stride])
    stacked = jnp.stack(cols, axis=0)                    # (kh*kw, N, C_in, H_out, W_out)
    patches_t = jnp.transpose(stacked, (2, 0, 1, 3, 4)).reshape(K, M)

    w_mat = conv_w.reshape(C_out, K).astype(jnp.float32)     # (C_out, K)
    b_col = conv_b.reshape(C_out, 1).astype(jnp.float32)
    g_col = gamma.reshape(C_out, 1).astype(jnp.float32)
    beta_col = beta.reshape(C_out, 1).astype(jnp.float32)

    # --- tile selection: pick the lane tile FIRST (big tiles amortize the ~0.35 us
    #     per-step overhead; double-buffered per-tile VMEM is only ~(K+C_out)*tm*8B),
    #     then pad M up to a multiple of tm.
    tm = min(2048, ((M + 127) // 128) * 128)
    grid_m = (M + tm - 1) // tm
    M_pad = grid_m * tm
    if M_pad != M:
        patches_t = jnp.pad(patches_t, ((0, 0), (0, M_pad - M)))

    resident_bytes = C_out * M_pad * 4                        # VMEM-resident conv output
    per_tile_bytes = (2 * K * tm + 2 * C_out * tm) * 4        # dbl-buffered P tile + stats
    use_fused = resident_bytes + per_tile_bytes <= _FUSED_VMEM_BUDGET

    if use_fused:
        # --- single Pallas call: conv + BN batch-stats + BN affine + ReLU.
        #     HBM sees exactly one read of the patch matrix and one write of y.
        # TODO(synk): for v7x megacore, split the resident stats per core (leading
        # size-2 "parallel" grid axis with per-core partial sums) instead of the
        # single-TC resident accumulator used here.
        y3 = pl.pallas_call(
            functools.partial(_fused_conv_bn_relu_kernel,
                              m_valid=M, tm=tm, grid_m=grid_m, eps=eps),
            out_shape=jax.ShapeDtypeStruct((grid_m, C_out, tm), jnp.float32),
            grid_spec=pltpu.PrefetchScalarGridSpec(
                num_scalar_prefetch=0,
                grid=(grid_m,),
                in_specs=[
                    pl.BlockSpec((C_out, K), lambda i: (0, 0)),    # weights (invariant)
                    pl.BlockSpec((K, tm), lambda i: (0, i)),       # patch tile
                    pl.BlockSpec((C_out, 1), lambda i: (0, 0)),    # bias
                    pl.BlockSpec((C_out, 1), lambda i: (0, 0)),    # gamma
                    pl.BlockSpec((C_out, 1), lambda i: (0, 0)),    # beta
                ],
                out_specs=pl.BlockSpec((grid_m, C_out, tm),
                                       lambda i: (0, 0, 0)),       # VMEM-resident
                scratch_shapes=[pltpu.VMEM((C_out, tm), jnp.float32),
                                pltpu.VMEM((C_out, tm), jnp.float32)],
            ),
            compiler_params=pltpu.CompilerParams(
                dimension_semantics=("arbitrary",),
                vmem_limit_bytes=48 * 1024 * 1024,
            ),
        )(w_mat, patches_t, b_col, g_col, beta_col)
        # (grid_m, C_out, tm) -> (C_out, M_pad); free reshape when grid_m == 1.
        y = jnp.transpose(y3, (1, 0, 2)).reshape(C_out, M_pad)
    else:
        # --- fallback (huge M): two-call path with the same improvements.
        conv_out, ch_sum, ch_sq = pl.pallas_call(
            functools.partial(_conv_stats_kernel, m_valid=M, tm=tm, grid_m=grid_m),
            out_shape=(
                jax.ShapeDtypeStruct((C_out, M_pad), jnp.float32),
                jax.ShapeDtypeStruct((C_out, 1), jnp.float32),
                jax.ShapeDtypeStruct((C_out, 1), jnp.float32),
            ),
            grid_spec=pltpu.PrefetchScalarGridSpec(
                num_scalar_prefetch=0,
                grid=(grid_m,),
                in_specs=[
                    pl.BlockSpec((C_out, K), lambda i: (0, 0)),
                    pl.BlockSpec((K, tm), lambda i: (0, i)),
                    pl.BlockSpec((C_out, 1), lambda i: (0, 0)),
                ],
                out_specs=(
                    pl.BlockSpec((C_out, tm), lambda i: (0, i)),
                    pl.BlockSpec((C_out, 1), lambda i: (0, 0)),
                    pl.BlockSpec((C_out, 1), lambda i: (0, 0)),
                ),
                scratch_shapes=[pltpu.VMEM((C_out, tm), jnp.float32),
                                pltpu.VMEM((C_out, tm), jnp.float32)],
            ),
            compiler_params=pltpu.CompilerParams(
                dimension_semantics=("arbitrary",),
            ),
        )(w_mat, patches_t, b_col)

        mean = ch_sum / M
        var = ch_sq / M - mean * mean                    # biased variance (as BN uses)
        inv_std = lax.rsqrt(var + eps)
        scale = g_col * inv_std
        shift = beta_col - mean * scale

        y = pl.pallas_call(
            _bn_relu_kernel,
            out_shape=jax.ShapeDtypeStruct((C_out, M_pad), jnp.float32),
            grid_spec=pltpu.PrefetchScalarGridSpec(
                num_scalar_prefetch=0,
                grid=(grid_m,),
                in_specs=[
                    pl.BlockSpec((C_out, tm), lambda i: (0, i)),
                    pl.BlockSpec((C_out, 1), lambda i: (0, 0)),
                    pl.BlockSpec((C_out, 1), lambda i: (0, 0)),
                ],
                out_specs=pl.BlockSpec((C_out, tm), lambda i: (0, i)),
            ),
            compiler_params=pltpu.CompilerParams(
                dimension_semantics=("parallel",)),
        )(conv_out, scale, shift)

    # --- glue: (C_out, M) is channel-major, so the relayout is a cheap leading-axis
    #     transpose; the 2x nearest upsample is a single fused XLA broadcast + reshape.
    # TODO(synk): for very large outputs, push the 2x H-row duplication into the
    # kernel's out index_map (extra size-2 grid axis); left to XLA's fused broadcast.
    y = y[:, :M].reshape(C_out, N, H_out, W_out)
    y = jnp.transpose(y, (1, 0, 2, 3))                            # (N, C_out, H, W)
    y = jnp.broadcast_to(y[:, :, :, None, :, None],
                         (N, C_out, H_out, 2, W_out, 2))
    return y.reshape(N, C_out, 2 * H_out, 2 * W_out)


# ---------------------------------------------------------------------------
# Pure-JAX reference (for a correctness check)
# ---------------------------------------------------------------------------
def _reference(x, conv_w, conv_b, gamma, beta, *, stride, padding, eps=1e-5):
    y = lax.conv_general_dilated(
        x, conv_w, window_strides=(stride, stride),
        padding=[(padding, padding), (padding, padding)],
        dimension_numbers=("NCHW", "OIHW", "NCHW"),
        precision=lax.Precision.HIGHEST)
    y = y + conv_b.reshape(1, -1, 1, 1)
    mean = jnp.mean(y, axis=(0, 2, 3), keepdims=True)
    var = jnp.var(y, axis=(0, 2, 3), keepdims=True)
    y = (y - mean) * lax.rsqrt(var + eps)
    y = y * gamma.reshape(1, -1, 1, 1) + beta.reshape(1, -1, 1, 1)
    y = jnp.maximum(y, 0.0)
    y = jnp.repeat(jnp.repeat(y, 2, axis=2), 2, axis=3)
    return y


# ---------------------------------------------------------------------------
# Main
# ---------------------------------------------------------------------------
if __name__ == "__main__":
    # DeConvBlock(in_channels=4, out_channels=8, kernel_size=3, stride=1, padding=1)
    N, C_in, H, W = 2, 4, 16, 16
    C_out, k, stride, padding = 8, 3, 1, 1

    key = jax.random.PRNGKey(0)
    kx, kw_, kb, kg, kbeta = jax.random.split(key, 5)

    x = jax.random.normal(kx, (N, C_in, H, W), dtype=jnp.float32)
    conv_w = 0.1 * jax.random.normal(kw_, (C_out, C_in, k, k), dtype=jnp.float32)
    conv_b = 0.1 * jax.random.normal(kb, (C_out,), dtype=jnp.float32)
    gamma = 1.0 + 0.1 * jax.random.normal(kg, (C_out,), dtype=jnp.float32)
    beta = 0.1 * jax.random.normal(kbeta, (C_out,), dtype=jnp.float32)

    fwd = jax.jit(functools.partial(deconv_block_forward,
                                    stride=stride, padding=padding))
    out = fwd(x, conv_w, conv_b, gamma, beta)
    out = jax.block_until_ready(out)
    assert out.shape == (N, C_out, 2 * H, 2 * W), out.shape

    ref = _reference(x, conv_w, conv_b, gamma, beta, stride=stride, padding=padding)
    assert jnp.allclose(out, ref, atol=1e-3, rtol=1e-3), float(
        jnp.max(jnp.abs(out - ref)))

    print("KERNEL_OK")
</pallas_src>

<mosaic_0001>
module attributes {stable_mosaic.version = 11 : i64} {
  func.func @_fused_conv_bn_relu_kernel(%arg0: i32, %arg1: memref<8x36xf32, #tpu.memory_space<vmem>>, %arg2: memref<36x512xf32, #tpu.memory_space<vmem>>, %arg3: memref<8x1xf32, #tpu.memory_space<vmem>>, %arg4: memref<8x1xf32, #tpu.memory_space<vmem>>, %arg5: memref<8x1xf32, #tpu.memory_space<vmem>>, %arg6: memref<1x8x512xf32, #tpu.memory_space<vmem>>, %arg7: memref<8x512xf32, #tpu.memory_space<vmem>>, %arg8: memref<8x512xf32, #tpu.memory_space<vmem>>) attributes {dimension_semantics = [#tpu.dimension_semantics<arbitrary>], iteration_bounds = array<i64: 1>, scalar_prefetch = 0 : i64, scratch_operands = 2 : i64, tpu.core_type = #tpu.core_type<tc>, window_params = [{pipeline_mode = #tpu.pipeline_mode<synchronous>, transform_indices = @transform_0, window_bounds = array<i64: 8, 36>}, {transform_indices = @transform_1, window_bounds = array<i64: 36, 512>}, {pipeline_mode = #tpu.pipeline_mode<synchronous>, transform_indices = @transform_2, window_bounds = array<i64: 8, 1>}, {pipeline_mode = #tpu.pipeline_mode<synchronous>, transform_indices = @transform_3, window_bounds = array<i64: 8, 1>}, {pipeline_mode = #tpu.pipeline_mode<synchronous>, transform_indices = @transform_4, window_bounds = array<i64: 8, 1>}, {pipeline_mode = #tpu.pipeline_mode<synchronous>, transform_indices = @transform_5, window_bounds = array<i64: 1, 8, 512>}]} {
    %c0 = arith.constant 0 : index
    %c0_0 = arith.constant 0 : index
    %0 = vector.load %arg1[%c0, %c0_0] : memref<8x36xf32, #tpu.memory_space<vmem>>, vector<8x36xf32>
    %c0_1 = arith.constant 0 : index
    %c0_2 = arith.constant 0 : index
    %1 = vector.load %arg2[%c0_1, %c0_2] : memref<36x512xf32, #tpu.memory_space<vmem>>, vector<36x512xf32>
    %cst = arith.constant dense<0.000000e+00> : vector<8x512xf32>
    %2 = tpu.matmul %0, %1, %cst {dimension_numbers = #tpu.dot_dimension_numbers<[1], [0], [0], [1], [0, 0, 1, 1], [], []>} : vector<8x36xf32>, vector<36x512xf32>, vector<8x512xf32> -> vector<8x512xf32>
    %c0_3 = arith.constant 0 : index
    %c0_4 = arith.constant 0 : index
    %3 = vector.load %arg3[%c0_3, %c0_4] : memref<8x1xf32, #tpu.memory_space<vmem>>, vector<8x1xf32>
    %4 = vector.broadcast %3 : vector<8x1xf32> to vector<8x512xf32>
    %5 = arith.addf %2, %4 : vector<8x512xf32>
    %6 = arith.index_cast %arg0 : i32 to index
    %c0_5 = arith.constant 0 : index
    %c0_6 = arith.constant 0 : index
    %7 = vector.load %arg6[%6, %c0_5, %c0_6] : memref<1x8x512xf32, #tpu.memory_space<vmem>>, vector<1x8x512xf32>
    %8 = vector.shape_cast %7 : vector<1x8x512xf32> to vector<8x512xf32>
    %9 = vector.shape_cast %5 : vector<8x512xf32> to vector<1x8x512xf32>
    tpu.vector_store %arg6[%6, %c0_5, %c0_6], %9 {strides = array<i32>} : memref<1x8x512xf32, #tpu.memory_space<vmem>>, vector<1x8x512xf32>,
    %c0_i32 = arith.constant 0 : i32
    %10 = arith.cmpi eq, %arg0, %c0_i32 : i32
    %11 = arith.extui %10 : i1 to i32
    %c0_i32_7 = arith.constant 0 : i32
    %12 = arith.cmpi ne, %11, %c0_i32_7 : i32
    scf.if %12 {
      %cst_18 = arith.constant 0.000000e+00 : f32
      %23 = vector.broadcast %cst_18 : f32 to vector<8x512xf32>
      %c0_19 = arith.constant 0 : index
      %c0_20 = arith.constant 0 : index
      %24 = vector.load %arg7[%c0_19, %c0_20] : memref<8x512xf32, #tpu.memory_space<vmem>>, vector<8x512xf32>
      tpu.vector_store %arg7[%c0_19, %c0_20], %23 {strides = array<i32>} : memref<8x512xf32, #tpu.memory_space<vmem>>, vector<8x512xf32>,
      %cst_21 = arith.constant 0.000000e+00 : f32
      %25 = vector.broadcast %cst_21 : f32 to vector<8x512xf32>
      %c0_22 = arith.constant 0 : index
      %c0_23 = arith.constant 0 : index
      %26 = vector.load %arg8[%c0_22, %c0_23] : memref<8x512xf32, #tpu.memory_space<vmem>>, vector<8x512xf32>
      tpu.vector_store %arg8[%c0_22, %c0_23], %25 {strides = array<i32>} : memref<8x512xf32, #tpu.memory_space<vmem>>, vector<8x512xf32>,
    } else {
    }
    %c0_8 = arith.constant 0 : index
    %c0_9 = arith.constant 0 : index
    %13 = vector.load %arg7[%c0_8, %c0_9] : memref<8x512xf32, #tpu.memory_space<vmem>>, vector<8x512xf32>
    %14 = arith.addf %13, %5 : vector<8x512xf32>
    %c0_10 = arith.constant 0 : index
    %c0_11 = arith.constant 0 : index
    %15 = vector.load %arg7[%c0_10, %c0_11] : memref<8x512xf32, #tpu.memory_space<vmem>>, vector<8x512xf32>
    tpu.vector_store %arg7[%c0_10, %c0_11], %14 {strides = array<i32>} : memref<8x512xf32, #tpu.memory_space<vmem>>, vector<8x512xf32>,
    %c0_12 = arith.constant 0 : index
    %c0_13 = arith.constant 0 : index
    %16 = vector.load %arg8[%c0_12, %c0_13] : memref<8x512xf32, #tpu.memory_space<vmem>>, vector<8x512xf32>
    %17 = arith.mulf %5, %5 : vector<8x512xf32>
    %18 = arith.addf %16, %17 : vector<8x512xf32>
    %c0_14 = arith.constant 0 : index
    %c0_15 = arith.constant 0 : index
    %19 = vector.load %arg8[%c0_14, %c0_15] : memref<8x512xf32, #tpu.memory_space<vmem>>, vector<8x512xf32>
    tpu.vector_store %arg8[%c0_14, %c0_15], %18 {strides = array<i32>} : memref<8x512xf32, #tpu.memory_space<vmem>>, vector<8x512xf32>,
    %c0_i32_16 = arith.constant 0 : i32
    %20 = arith.cmpi eq, %arg0, %c0_i32_16 : i32
    %21 = arith.extui %20 : i1 to i32
    %c0_i32_17 = arith.constant 0 : i32
    %22 = arith.cmpi ne, %21, %c0_i32_17 : i32
    scf.if %22 {
      %c0_18 = arith.constant 0 : index
      %c0_19 = arith.constant 0 : index
      %23 = vector.load %arg7[%c0_18, %c0_19] : memref<8x512xf32, #tpu.memory_space<vmem>>, vector<8x512xf32>
      %cst_20 = arith.constant dense<0.000000e+00> : vector<8xf32>
      %24 = vector.multi_reduction <add>, %23, %cst_20 [1] : vector<8x512xf32> to vector<8xf32>
      %25 = vector.shape_cast %24 : vector<8xf32> to vector<8x1xf32>
      %cst_21 = arith.constant 0.001953125 : f32
      %26 = vector.broadcast %cst_21 : f32 to vector<8x1xf32>
      %27 = arith.mulf %25, %26 : vector<8x1xf32>
      %c0_22 = arith.constant 0 : index
      %c0_23 = arith.constant 0 : index
      %28 = vector.load %arg8[%c0_22, %c0_23] : memref<8x512xf32, #tpu.memory_space<vmem>>, vector<8x512xf32>
      %cst_24 = arith.constant dense<0.000000e+00> : vector<8xf32>
      %29 = vector.multi_reduction <add>, %28, %cst_24 [1] : vector<8x512xf32> to vector<8xf32>
      %30 = vector.shape_cast %29 : vector<8xf32> to vector<8x1xf32>
      %cst_25 = arith.constant 0.001953125 : f32
      %31 = vector.broadcast %cst_25 : f32 to vector<8x1xf32>
      %32 = arith.mulf %30, %31 : vector<8x1xf32>
      %33 = arith.mulf %27, %27 : vector<8x1xf32>
      %34 = arith.subf %32, %33 : vector<8x1xf32>
      %c0_26 = arith.constant 0 : index
      %c0_27 = arith.constant 0 : index
      %35 = vector.load %arg4[%c0_26, %c0_27] : memref<8x1xf32, #tpu.memory_space<vmem>>, vector<8x1xf32>
      %cst_28 = arith.constant 9.99999974E-6 : f32
      %36 = vector.broadcast %cst_28 : f32 to vector<8x1xf32>
      %37 = arith.addf %34, %36 : vector<8x1xf32>
      %38 = math.rsqrt %37 : vector<8x1xf32>
      %39 = arith.mulf %35, %38 : vector<8x1xf32>
      %c0_29 = arith.constant 0 : index
      %c0_30 = arith.constant 0 : index
      %40 = vector.load %arg5[%c0_29, %c0_30] : memref<8x1xf32, #tpu.memory_space<vmem>>, vector<8x1xf32>
      %41 = arith.mulf %27, %39 : vector<8x1xf32>
      %42 = arith.subf %40, %41 : vector<8x1xf32>
      %c0_31 = arith.constant 0 : index
      %c0_32 = arith.constant 0 : index
      %c0_33 = arith.constant 0 : index
      %43 = vector.load %arg6[%c0_31, %c0_32, %c0_33] : memref<1x8x512xf32, #tpu.memory_space<vmem>>, vector<1x8x512xf32>
      %44 = vector.shape_cast %39 : vector<8x1xf32> to vector<1x8x1xf32>
      %45 = vector.broadcast %44 : vector<1x8x1xf32> to vector<1x8x512xf32>
      %46 = arith.mulf %43, %45 : vector<1x8x512xf32>
      %47 = vector.shape_cast %42 : vector<8x1xf32> to vector<1x8x1xf32>
      %48 = vector.broadcast %47 : vector<1x8x1xf32> to vector<1x8x512xf32>
      %49 = arith.addf %46, %48 : vector<1x8x512xf32>
      %cst_34 = arith.constant 0.000000e+00 : f32
      %50 = vector.broadcast %cst_34 : f32 to vector<1x8x512xf32>
      %51 = arith.maximumf %49, %50 : vector<1x8x512xf32>
      %c0_35 = arith.constant 0 : index
      %c0_36 = arith.constant 0 : index
      %c0_37 = arith.constant 0 : index
      %52 = vector.load %arg6[%c0_35, %c0_36, %c0_37] : memref<1x8x512xf32, #tpu.memory_space<vmem>>, vector<1x8x512xf32>
      tpu.vector_store %arg6[%c0_35, %c0_36, %c0_37], %51 {strides = array<i32>} : memref<1x8x512xf32, #tpu.memory_space<vmem>>, vector<1x8x512xf32>,
    } else {
    }
    return
  }
  func.func @transform_0(%arg0: i32) -> (i32, i32) {
    %c0_i32 = arith.constant 0 : i32
    %c0_i32_0 = arith.constant 0 : i32
    %c0_i32_1 = arith.constant 0 : i32
    return %c0_i32, %c0_i32_0 : i32, i32
  }
  func.func @transform_1(%arg0: i32) -> (i32, i32) {
    %c0_i32 = arith.constant 0 : i32
    %c0_i32_0 = arith.constant 0 : i32
    return %c0_i32, %arg0 : i32, i32
  }
  func.func @transform_2(%arg0: i32) -> (i32, i32) {
    %c0_i32 = arith.constant 0 : i32
    %c0_i32_0 = arith.constant 0 : i32
    %c0_i32_1 = arith.constant 0 : i32
    return %c0_i32, %c0_i32_0 : i32, i32
  }
  func.func @transform_3(%arg0: i32) -> (i32, i32) {
    %c0_i32 = arith.constant 0 : i32
    %c0_i32_0 = arith.constant 0 : i32
    %c0_i32_1 = arith.constant 0 : i32
    return %c0_i32, %c0_i32_0 : i32, i32
  }
  func.func @transform_4(%arg0: i32) -> (i32, i32) {
    %c0_i32 = arith.constant 0 : i32
    %c0_i32_0 = arith.constant 0 : i32
    %c0_i32_1 = arith.constant 0 : i32
    return %c0_i32, %c0_i32_0 : i32, i32
  }
  func.func @transform_5(%arg0: i32) -> (i32, i32, i32) {
    %c0_i32 = arith.constant 0 : i32
    %c0_i32_0 = arith.constant 0 : i32
    %c0_i32_1 = arith.constant 0 : i32
    %c0_i32_2 = arith.constant 0 : i32
    return %c0_i32, %c0_i32_0, %c0_i32_1 : i32, i32, i32
  }
}

</mosaic_0001>

<llo_original>
// kernel: deconv_block_forward.1
$region0: #{deconv_block_forward.1}
  #allocation0 [shape = 'u32[]', space=smem, size = 0x4, offset = 0x4, fixed_abs, tag = 'smem constant byte address 0x4 - core index']
  #allocation1 [shape = 'u32[144,128]{1,0:T(1,128)}', space=vmem, size = 0x12000, scoped, tag = 'internal scratch']
  #allocation2 [shape = 'f32[8,512]{1,0:T(8,128)}', space=vmem, size = 0x4000, scoped, tag = 'scratch operand']
  #allocation3 [shape = 'f32[8,512]{1,0:T(8,128)}', space=vmem, size = 0x4000, scoped, tag = 'scratch operand']
  %s0 = inlined_call_operand.vmem [shape: f32[8,36], index: 0, kind: input, shape index: {}]
  %s1 = inlined_call_operand.vmem [shape: f32[36,512], index: 1, kind: input, shape index: {}]
  %s2 = inlined_call_operand.vmem [shape: f32[8,1], index: 2, kind: input, shape index: {}]
  %s3 = inlined_call_operand.vmem [shape: f32[8,1], index: 3, kind: input, shape index: {}]
  %s4 = inlined_call_operand.vmem [shape: f32[8,1], index: 4, kind: input, shape index: {}]
  %s5 = inlined_call_operand.vmem [shape: f32[1,8,512], index: 5, kind: output, shape index: {}]
  %s6 = sld [smem:[#allocation0]]
  $region38: #{deconv_block_forward.1} parent=0
    _
  %s8 = ssub.s32 1, %s6
  %s9 = scalar_select 0, %s8, %s6
  // Predicated region
  $region2: #{deconv_block_forward.1} parent=0 // pred_check
    _
  $region3: #{deconv_block_forward.1} parent=0 // pred_check_branch
    %11 = sbr.rel (0) target = $region5
  $region4: #{deconv_block_forward.1} parent=0 // pred_region
    _
  $region5: #{deconv_block_forward.1} parent=0 // pred_fallthru
    _
  // Predicated region
  $region6: #{deconv_block_forward.1} parent=0 // pred_check
    _
  $region7: #{deconv_block_forward.1} parent=0 // pred_check_branch
    %13 = sbr.rel (0) target = $region9
  $region8: #{deconv_block_forward.1} parent=0 // pred_region
    _
  $region9: #{deconv_block_forward.1} parent=0 // pred_fallthru
    _
  // Predicated region
  $region10: #{deconv_block_forward.1} parent=0 // pred_check
    _
  $region11: #{deconv_block_forward.1} parent=0 // pred_check_branch
    %15 = sbr.rel (0) target = $region13
  $region12: #{deconv_block_forward.1} parent=0 // pred_region
    _
  $region13: #{deconv_block_forward.1} parent=0 // pred_fallthru
    _
  // Predicated region
  $region14: #{deconv_block_forward.1} parent=0 // pred_check
    _
  $region15: #{deconv_block_forward.1} parent=0 // pred_check_branch
    %17 = sbr.rel (0) target = $region17
  $region16: #{deconv_block_forward.1} parent=0 // pred_region
    _
  $region17: #{deconv_block_forward.1} parent=0 // pred_fallthru
    _
  // Predicated region
  $region18: #{deconv_block_forward.1} parent=0 // pred_check
    _
  $region19: #{deconv_block_forward.1} parent=0 // pred_check_branch
    %19 = sbr.rel (0) target = $region21
  $region20: #{deconv_block_forward.1} parent=0 // pred_region
    _
  $region21: #{deconv_block_forward.1} parent=0 // pred_fallthru
    _
  %v20 = vld [vmem:[%s0] sm:$0xff]
  %v21 = vld [vmem:[%s1] sm:$0xff]
  %v22 = vld [vmem:[%s1 + $0x8] sm:$0xff]
  %v23 = vld [vmem:[%s1 + $0x10] sm:$0xff]
  %v24 = vld [vmem:[%s1 + $0x18] sm:$0xff]
  %v25 = vld [vmem:[%s1 + $0x20] sm:$0xff]
  %v26 = vld [vmem:[%s1 + $0x28] sm:$0xff]
  %v27 = vld [vmem:[%s1 + $0x30] sm:$0xff]
  %v28 = vld [vmem:[%s1 + $0x38] sm:$0xff]
  %v29 = vld [vmem:[%s1 + $0x40] sm:$0xff]
  %v30 = vld [vmem:[%s1 + $0x48] sm:$0xff]
  %v31 = vld [vmem:[%s1 + $0x50] sm:$0xff]
  %v32 = vld [vmem:[%s1 + $0x58] sm:$0xff]
  %v33 = vld [vmem:[%s1 + $0x60] sm:$0xff]
  %v34 = vld [vmem:[%s1 + $0x68] sm:$0xff]
  %v35 = vld [vmem:[%s1 + $0x70] sm:$0xff]
  %v36 = vld [vmem:[%s1 + $0x78] sm:$0xff]
  %v37 = vld [vmem:[%s1 + $0x80] sm:$0xf]
  %v38 = vld [vmem:[%s1 + $0x88] sm:$0xf]
  %v39 = vld [vmem:[%s1 + $0x90] sm:$0xf]
  %v40 = vld [vmem:[%s1 + $0x98] sm:$0xf]
  %v41 = vld [vmem:[%s2] sm:$0xff]
  %43 = vset.pattern.permute.xlu0 0
  %44 = vperm.xlu0 %43, %v41
  %v45 = vpop.permute.xlu0 %44
  %vm47 = vcmask 293888
  %v49 = vsel %vm47, %v20, 0
  %vm51 = vcmask 1043456
  %v53 = vsel %vm51, %v37, 0
  %v56 = vsel %vm51, %v38, 0
  %v59 = vsel %vm51, %v39, 0
  %v62 = vsel %vm51, %v40, 0
  %64 = vmatprep.subr.mxu0 0.0
  %65 = vmatpush1.msra.mxu0 0.0
  %66 = vmatprep.subr.mxu0 0.0
  %67 = vmatpush1.msra.mxu0 0.0
  %68 = vmatprep.subr.mxu0 0.0
  %69 = vmatpush1.msra.mxu0 0.0
  %70 = vmatprep.subr.mxu0 0.0
  %71 = vmatpush1.msra.mxu0 0.0
  %72 = vmatprep.subr.mxu0 0.0
  %73 = vmatpush1.msra.mxu0 0.0
  %74 = vmatprep.subr.mxu0 0.0
  %75 = vmatpush1.msra.mxu0 0.0
  %76 = vmatprep.subr.mxu0 0.0
  %77 = vmatpush1.msra.mxu0 0.0
  %78 = vmatprep.subr.mxu0 0.0
  %79 = vmatpush1.msra.mxu0 0.0
  %80 = vmatprep.subr.mxu0 0.0
  %81 = vmatpush1.msra.mxu0 0.0
  %82 = vmatprep.subr.mxu0 0.0
  %83 = vmatpush1.msra.mxu0 0.0
  %84 = vmatprep.subr.mxu0 0.0
  %85 = vmatpush1.msra.mxu0 0.0
  %86 = vmatprep.subr.mxu0 %v56
  %87 = vmatpush1.msra.mxu0 %v53
  %88 = vmatprep.subr.mxu0 %v34
  %89 = vmatpush1.msra.mxu0 %v33
  %90 = vmatprep.subr.mxu0 %v30
  %91 = vmatpush1.msra.mxu0 %v29
  %92 = vmatprep.subr.mxu0 %v26
  %93 = vmatpush1.msra.mxu0 %v25
  %94 = vmatprep.subr.mxu0 %v22
  %95 = vmatpush1.msra.mxu0 %v21
  %96 = vmatprep.subr.mxu0 0.0
  %97 = vmatpush2.msra.mxu0 0.0
  %98 = vmatprep.subr.mxu0 0.0
  %99 = vmatpush2.msra.mxu0 0.0
  %100 = vmatprep.subr.mxu0 0.0
  %101 = vmatpush2.msra.mxu0 0.0
  %102 = vmatprep.subr.mxu0 0.0
  %103 = vmatpush2.msra.mxu0 0.0
  %104 = vmatprep.subr.mxu0 0.0
  %105 = vmatpush2.msra.mxu0 0.0
  %106 = vmatprep.subr.mxu0 0.0
  %107 = vmatpush2.msra.mxu0 0.0
  %108 = vmatprep.subr.mxu0 0.0
  %109 = vmatpush2.msra.mxu0 0.0
  %110 = vmatprep.subr.mxu0 0.0
  %111 = vmatpush2.msra.mxu0 0.0
  %112 = vmatprep.subr.mxu0 0.0
  %113 = vmatpush2.msra.mxu0 0.0
  %114 = vmatprep.subr.mxu0 0.0
  %115 = vmatpush2.msra.mxu0 0.0
  %116 = vmatprep.subr.mxu0 0.0
  %117 = vmatpush2.msra.mxu0 0.0
  %118 = vmatprep.subr.mxu0 0.0
  %119 = vmatpush2.msra.mxu0 0.0
  %120 = vmatprep.subr.mxu0 0.0
  %121 = vmatpush2.msra.mxu0 0.0
  %122 = vmatprep.subr.mxu0 0.0
  %123 = vmatpush2.msra.mxu0 0.0
  %124 = vmatprep.subr.mxu0 0.0
  %125 = vmatpush2.msra.mxu0 0.0
  %126 = vmatprep.subr.mxu0 0.0
  %127 = vmatpush2.msra.mxu0 0.0
  %128 = vmatprep.mubr.f32.mxu0 0.0
  %129 = vmatmul.mubr.f32.gmra.mxu0 %v49
  %v130 = vpop.f32.mrf.mxu0
  %v131 = vadd.f32 %v45, %v130
  %v132 = vpop.f32.mrf.mxu0
  %v133 = vadd.f32 %v45, %v132
  %134 = vdwg.mxu0
  %135 = vmatprep.subr.mxu0 0.0
  %136 = vmatpush1.msra.mxu0 0.0
  %137 = vmatprep.subr.mxu0 0.0
  %138 = vmatpush1.msra.mxu0 0.0
  %139 = vmatprep.subr.mxu0 0.0
  %140 = vmatpush1.msra.mxu0 0.0
  %141 = vmatprep.subr.mxu0 0.0
  %142 = vmatpush1.msra.mxu0 0.0
  %143 = vmatprep.subr.mxu0 0.0
  %144 = vmatpush1.msra.mxu0 0.0
  %145 = vmatprep.subr.mxu0 0.0
  %146 = vmatpush1.msra.mxu0 0.0
  %147 = vmatprep.subr.mxu0 0.0
  %148 = vmatpush1.msra.mxu0 0.0
  %149 = vmatprep.subr.mxu0 0.0
  %150 = vmatpush1.msra.mxu0 0.0
  %151 = vmatprep.subr.mxu0 0.0
  %152 = vmatpush1.msra.mxu0 0.0
  %153 = vmatprep.subr.mxu0 0.0
  %154 = vmatpush1.msra.mxu0 0.0
  %155 = vmatprep.subr.mxu0 0.0
  %156 = vmatpush1.msra.mxu0 0.0
  %157 = vmatprep.subr.mxu0 %v62
  %158 = vmatpush1.msra.mxu0 %v59
  %159 = vmatprep.subr.mxu0 %v36
  %160 = vmatpush1.msra.mxu0 %v35
  %161 = vmatprep.subr.mxu0 %v32
  %162 = vmatpush1.msra.mxu0 %v31
  %163 = vmatprep.subr.mxu0 %v28
  %164 = vmatpush1.msra.mxu0 %v27
  %165 = vmatprep.subr.mxu0 %v24
  %166 = vmatpush1.msra.mxu0 %v23
  %167 = vmatprep.subr.mxu0 0.0
  %168 = vmatpush2.msra.mxu0 0.0
  %169 = vmatprep.subr.mxu0 0.0
  %170 = vmatpush2.msra.mxu0 0.0
  %171 = vmatprep.subr.mxu0 0.0
  %172 = vmatpush2.msra.mxu0 0.0
  %173 = vmatprep.subr.mxu0 0.0
  %174 = vmatpush2.msra.mxu0 0.0
  %175 = vmatprep.subr.mxu0 0.0
  %176 = vmatpush2.msra.mxu0 0.0
  %177 = vmatprep.subr.mxu0 0.0
  %178 = vmatpush2.msra.mxu0 0.0
  %179 = vmatprep.subr.mxu0 0.0
  %180 = vmatpush2.msra.mxu0 0.0
  %181 = vmatprep.subr.mxu0 0.0
  %182 = vmatpush2.msra.mxu0 0.0
  %183 = vmatprep.subr.mxu0 0.0
  %184 = vmatpush2.msra.mxu0 0.0
  %185 = vmatprep.subr.mxu0 0.0
  %186 = vmatpush2.msra.mxu0 0.0
  %187 = vmatprep.subr.mxu0 0.0
  %188 = vmatpush2.msra.mxu0 0.0
  %189 = vmatprep.subr.mxu0 0.0
  %190 = vmatpush2.msra.mxu0 0.0
  %191 = vmatprep.subr.mxu0 0.0
  %192 = vmatpush2.msra.mxu0 0.0
  %193 = vmatprep.subr.mxu0 0.0
  %194 = vmatpush2.msra.mxu0 0.0
  %195 = vmatprep.subr.mxu0 0.0
  %196 = vmatpush2.msra.mxu0 0.0
  %197 = vmatprep.subr.mxu0 0.0
  %198 = vmatpush2.msra.mxu0 0.0
  %199 = vmatprep.mubr.f32.mxu0 0.0
  %200 = vmatmul.mubr.f32.gmra.mxu0 %v49
  %v201 = vpop.f32.mrf.mxu0
  %v202 = vadd.f32 %v45, %v201
  %v203 = vpop.f32.mrf.mxu0
  %v204 = vadd.f32 %v45, %v203
  %205 = vdwg.mxu0
  %s206 = smul.u32 0, 4
  %s207 = smul.addr %s206, 8
  %s208 = scalar_lea.vmem %s5, %s207
  %209 = vst [vmem:[%s208] sm:$0xff] %v131
  %210 = vst [vmem:[%s208 + $0x8] sm:$0xff] %v133
  %211 = vst [vmem:[%s208 + $0x10] sm:$0xff] %v202
  %212 = vst [vmem:[%s208 + $0x18] sm:$0xff] %v204
  %p213 = scmp.eq.s32.totalorder 0, 0
  // Predicated region
  $region22: #{deconv_block_forward.1} parent=0 // pred_check
    %p214 = pneg %p213
  $region23: #{deconv_block_forward.1} parent=0 // pred_check_branch
    %216 = sbr.rel (%p214) target = $region25
  $region24: #{deconv_block_forward.1} parent=0 // pred_region
    %217 = vst [vmem:[#allocation2] sm:$0xff] 0.0
    %218 = vst [vmem:[#allocation2 + $0x8] sm:$0xff] 0.0
    %219 = vst [vmem:[#allocation2 + $0x10] sm:$0xff] 0.0
    %220 = vst [vmem:[#allocation2 + $0x18] sm:$0xff] 0.0
    %221 = vst [vmem:[#allocation3] sm:$0xff] 0.0
    %222 = vst [vmem:[#allocation3 + $0x8] sm:$0xff] 0.0
    %223 = vst [vmem:[#allocation3 + $0x10] sm:$0xff] 0.0
    %224 = vst [vmem:[#allocation3 + $0x18] sm:$0xff] 0.0
  $region25: #{deconv_block_forward.1} parent=0 // pred_fallthru
    _
  %v225 = vld [vmem:[#allocation2] sm:$0xff]
  %v226 = vld [vmem:[#allocation2 + $0x8] sm:$0xff]
  %v227 = vld [vmem:[#allocation2 + $0x10] sm:$0xff]
  %v228 = vld [vmem:[#allocation2 + $0x18] sm:$0xff]
  %v229 = vadd.f32 %v225, %v131
  %v230 = vadd.f32 %v226, %v133
  %v231 = vadd.f32 %v227, %v202
  %v232 = vadd.f32 %v228, %v204
  %233 = vst [vmem:[#allocation2] sm:$0xff] %v229
  %234 = vst [vmem:[#allocation2 + $0x8] sm:$0xff] %v230
  %235 = vst [vmem:[#allocation2 + $0x10] sm:$0xff] %v231
  %236 = vst [vmem:[#allocation2 + $0x18] sm:$0xff] %v232
  %v237 = vld [vmem:[#allocation3] sm:$0xff]
  %v238 = vld [vmem:[#allocation3 + $0x8] sm:$0xff]
  %v239 = vld [vmem:[#allocation3 + $0x10] sm:$0xff]
  %v240 = vld [vmem:[#allocation3 + $0x18] sm:$0xff]
  %v241 = vmul.f32 %v131, %v131
  %v242 = vmul.f32 %v133, %v133
  %v243 = vmul.f32 %v202, %v202
  %v244 = vmul.f32 %v204, %v204
  %v245 = vadd.f32 %v237, %v241
  %v246 = vadd.f32 %v238, %v242
  %v247 = vadd.f32 %v239, %v243
  %v248 = vadd.f32 %v240, %v244
  %249 = vst [vmem:[#allocation3] sm:$0xff] %v245
  %250 = vst [vmem:[#allocation3 + $0x8] sm:$0xff] %v246
  %251 = vst [vmem:[#allocation3 + $0x10] sm:$0xff] %v247
  %252 = vst [vmem:[#allocation3 + $0x18] sm:$0xff] %v248
  // Predicated region
  $region26: #{deconv_block_forward.1} parent=0 // pred_check
    %p253 = pneg %p213
  $region27: #{deconv_block_forward.1} parent=0 // pred_check_branch
    %255 = sbr.rel (%p253) target = $region29
  $region28: #{deconv_block_forward.1} parent=0 // pred_region
    %v256 = vld [vmem:[#allocation2] sm:$0xff]
    %v257 = vld [vmem:[#allocation2 + $0x8] sm:$0xff]
    %v258 = vld [vmem:[#allocation2 + $0x10] sm:$0xff]
    %v259 = vld [vmem:[#allocation2 + $0x18] sm:$0xff]
    %v260 = vadd.f32 %v256, %v257
    %v261 = vadd.f32 %v260, %v258
    %v262 = vadd.f32 %v261, %v259
    %263 = vadd.xlane.f32.xlu0 %v262
    %v264 = vpop.xlane.xlu0 %263
    %v265 = vmul.f32 %v264, 0.001953125
    %v266 = vld [vmem:[#allocation3] sm:$0xff]
    %v267 = vld [vmem:[#allocation3 + $0x8] sm:$0xff]
    %v268 = vld [vmem:[#allocation3 + $0x10] sm:$0xff]
    %v269 = vld [vmem:[#allocation3 + $0x18] sm:$0xff]
    %v270 = vadd.f32 %v266, %v267
    %v271 = vadd.f32 %v270, %v268
    %v272 = vadd.f32 %v271, %v269
    %273 = vadd.xlane.f32.xlu0 %v272
    %v274 = vpop.xlane.xlu0 %273
    %v275 = vmul.f32 %v274, 0.001953125
    %v276 = vmul.f32 %v265, %v265
    %v277 = vsub.f32 %v275, %v276
    %v278 = vld [vmem:[%s3] sm:$0xff]
    %v279 = vadd.f32 %v277, 1e-05
    %v280 = vrsqrt.pop %v279
    %v281 = vmul.f32 %v278, %v280
    %v282 = vld [vmem:[%s4] sm:$0xff]
    %v283 = vmul.f32 %v265, %v281
    %v284 = vsub.f32 %v282, %v283
    %v285 = vld [vmem:[%s5] sm:$0xff]
    %v286 = vld [vmem:[%s5 + $0x8] sm:$0xff]
    %v287 = vld [vmem:[%s5 + $0x10] sm:$0xff]
    %v288 = vld [vmem:[%s5 + $0x18] sm:$0xff]
    %290 = vset.pattern.permute.xlu0 0
    %291 = vperm.xlu0 %290, %v281
    %v292 = vpop.permute.xlu0 %291
    %v294 = vmul.f32 %v285, %v292
    %v295 = vmul.f32 %v286, %v292
    %v296 = vmul.f32 %v287, %v292
    %v297 = vmul.f32 %v288, %v292
    %299 = vset.pattern.permute.xlu0 0
    %300 = vperm.xlu0 %299, %v284
    %v301 = vpop.permute.xlu0 %300
    %v303 = vadd.f32 %v294, %v301
    %v304 = vadd.f32 %v295, %v301
    %v305 = vadd.f32 %v296, %v301
    %v306 = vadd.f32 %v297, %v301
    %v307 = vmax.f32 %v303, 0.0
    %v308 = vmax.f32 %v304, 0.0
    %v309 = vmax.f32 %v305, 0.0
    %v310 = vmax.f32 %v306, 0.0
    %311 = vst [vmem:[%s5] sm:$0xff] %v307
    %312 = vst [vmem:[%s5 + $0x8] sm:$0xff] %v308
    %313 = vst [vmem:[%s5 + $0x10] sm:$0xff] %v309
    %314 = vst [vmem:[%s5 + $0x18] sm:$0xff] %v310
  $region29: #{deconv_block_forward.1} parent=0 // pred_fallthru
    _
  // Predicated region
  $region30: #{deconv_block_forward.1} parent=0 // pred_check
    _
  $region31: #{deconv_block_forward.1} parent=0 // pred_check_branch
    %316 = sbr.rel (0) target = $region33
  $region32: #{deconv_block_forward.1} parent=0 // pred_region
    _
  $region33: #{deconv_block_forward.1} parent=0 // pred_fallthru
    _
  // Predicated region
  $region34: #{deconv_block_forward.1} parent=0 // pred_check
    _
  $region35: #{deconv_block_forward.1} parent=0 // pred_check_branch
    %318 = sbr.rel (0) target = $region37
  $region36: #{deconv_block_forward.1} parent=0 // pred_region
    _
  $region37: #{deconv_block_forward.1} parent=0 // pred_fallthru
    _

</llo_original>
